<compile_context>
chip_gen: v7x
topology: tpu7x:2x2x1
jax: 0.10.0
libtpu: 0.0.40
codegen_flags: <defaults>
</compile_context>

<pallas_src>
import functools

import jax
import jax.numpy as jnp
import numpy as np
from jax.experimental import pallas as pl
from jax.experimental.pallas import tpu as pltpu


def _round_up(x, m):
    return (x + m - 1) // m * m


def _ccl_kernel(*refs, threshold, n_groups, has_weights, valid_rows, tile_rows):
    it = iter(refs)
    sel_ref = next(it) if n_groups > 1 else None
    p1_ref = next(it)
    p2_ref = next(it)
    w_ref = next(it) if has_weights else None
    out_ref = next(it)

    p1 = p1_ref[...].astype(jnp.float32)            # (tr, W)
    p2 = p2_ref[...].astype(jnp.float32)            # (tr, W)
    prod = p1 * p2                                   # VPU elementwise

    if n_groups == 1:
        # plain per-row reduce over the class axis
        inner = jnp.sum(prod, axis=1, keepdims=True)                     # (tr, 1)
    else:
        # grouped lane reduce via constant block-diagonal ones on the MXU
        inner = jnp.dot(prod, sel_ref[...], preferred_element_type=jnp.float32)  # (tr, G)

    # Row-validity mask: the last grid block may be partial (garbage rows).
    row0 = pl.program_id(0) * tile_rows
    rows = jax.lax.broadcasted_iota(jnp.int32, inner.shape, 0) + row0
    valid = rows < valid_rows

    # Garbage rows -> inner = 1 -> log = 0 (also keeps NaN/Inf out of the sum).
    inner = jnp.where(valid, inner, 1.0)
    log_i = jnp.log(inner)                                               # EUP

    if has_weights:
        # Garbage-row weights are forced to 0, which zeroes their contribution.
        w = jnp.where(valid, w_ref[...].astype(jnp.float32), 0.0)
        pos = w > 0.0
        neg = w < 0.0
        # negatives: zero out log values below threshold, scale by 0.2
        log_n = jnp.where(log_i < threshold, 0.0, log_i)
        contrib = jnp.where(pos, w * log_i,
                            jnp.where(neg, 0.2 * w * log_n, 0.0))
    else:
        contrib = log_i          # invalid rows already contribute exactly 0

    # Per-step partial sum, splat into this step's dense (8, 128) output block.
    partial = jnp.sum(contrib, axis=1, keepdims=True)    # (tr, 1)
    partial = jnp.sum(partial, axis=0, keepdims=True)    # (1, 1)
    out_ref[...] = jnp.broadcast_to(partial, out_ref.shape)


def cluster_consistency_loss(probs1, probs2, weights=None,
                             temperature=0.2, threshold=-5.0,
                             vmem_budget_bytes=24 << 20):
    """Pallas TPU implementation of ClusterConsistencyLoss.forward."""
    del temperature  # unused in the reference forward pass
    N, C = probs1.shape
    has_weights = weights is not None
    itemsize = jnp.dtype(probs1.dtype).itemsize

    # ---- lane packing: G consecutive samples share one 128-lane row ---------
    # Pick the largest power-of-two group that fills 128 lanes AND divides N,
    # so the host reshape is copy-free (no padding concatenate, ever).
    if C < 128 and 128 % C == 0:
        G = 128 // C
        while G > 1 and N % G:
            G //= 2
    else:
        G = 1
    W = G * C                       # packed row width (lanes)
    R = N // G                      # packed rows (exact: G divides N)

    # ---- tile-size selection -------------------------------------------------
    # Big enough to amortize the ~0.35us per-step overhead, small enough that
    # the grid has ~8 steps (pipelining + both v7x TensorCores), capped by the
    # VMEM budget (double-buffered inputs).
    per_row = 2 * 2 * W * itemsize + (2 * G * 4 if has_weights else 0)
    gran = 8 if itemsize >= 4 else 16
    if R <= gran:
        tr = R                      # single block; second-minor dim == full dim
    else:
        budget_rows = max(gran, (vmem_budget_bytes // per_row) // gran * gran)
        tr = _round_up(-(-R // 8), gran)          # aim for ~8 grid steps
        tr = max(tr, 256)                          # keep per-step DMA sizeable
        tr = min(tr, 2048, budget_rows, (R // gran) * gran)
    grid_steps = -(-R // tr)

    # ---- copy-free packing of the inputs ------------------------------------
    p1p = probs1.reshape(R, W)
    p2p = probs2.reshape(R, W)

    args = []
    in_specs = []
    if G > 1:
        # block-diagonal ones: sel[l, g] = 1 iff lane l belongs to packed sample g
        lane = np.arange(W)[:, None]
        grp = np.arange(G)[None, :]
        sel = jnp.asarray(((lane // C) == grp).astype(np.float32))
        args.append(sel)
        in_specs.append(pl.BlockSpec((W, G), lambda i: (0, 0)))   # loaded once

    args += [p1p, p2p]
    in_specs += [pl.BlockSpec((tr, W), lambda i: (i, 0)),
                 pl.BlockSpec((tr, W), lambda i: (i, 0))]

    if has_weights:
        w = weights.reshape(R, G).astype(jnp.float32)
        count = jnp.sum(weights != 0).astype(jnp.float32)
        args.append(w)
        in_specs.append(pl.BlockSpec((tr, G), lambda i: (i, 0)))
    else:
        count = jnp.float32(N)

    kernel = functools.partial(
        _ccl_kernel, threshold=float(threshold), n_groups=G,
        has_weights=has_weights, valid_rows=R, tile_rows=tr)

    out_rows = grid_steps * 8
    bytes_accessed = (2 * N * C * itemsize
                      + (N * 4 if has_weights else 0)
                      + out_rows * 128 * 4
                      + (W * G * 4 if G > 1 else 0))
    cost = pl.CostEstimate(
        flops=int(3 * N * C + (2 * N * C * G if G > 1 else 0)),
        transcendentals=int(N),
        bytes_accessed=int(bytes_accessed))

    vmem_need = tr * per_row + (2 * W * G * 4 if G > 1 else 0) + 2 * 8 * 128 * 4
    compiler_params = pltpu.CompilerParams(
        dimension_semantics=("parallel",),
        vmem_limit_bytes=int(min(max(2 * vmem_need + (4 << 20), 16 << 20),
                                 48 << 20)))

    partials = pl.pallas_call(
        kernel,
        out_shape=jax.ShapeDtypeStruct((out_rows, 128), jnp.float32),
        grid_spec=pltpu.PrefetchScalarGridSpec(
            num_scalar_prefetch=0,
            grid=(grid_steps,),
            in_specs=in_specs,
            out_specs=pl.BlockSpec((8, 128), lambda i: (i, 0)),
        ),
        compiler_params=compiler_params,
        cost_estimate=cost,
    )(*args)

    # one partial per grid step (each (8,128) block is a splat of its partial)
    total = jnp.sum(partials[::8, 0])
    return -total / count


def _reference(probs1, probs2, weights=None, threshold=-5.0):
    """Float64 numpy reference mirroring the PyTorch forward exactly."""
    p1 = np.asarray(probs1, np.float64)
    p2 = np.asarray(probs2, np.float64)
    if weights is None:
        inner = (p1 * p2).sum(axis=1)
        return -np.mean(np.log(inner))
    w = np.asarray(weights, np.float64)
    p = np.where(w > 0)[0]
    n = np.where(w < 0)[0]
    inner_p = (p1[p] * p2[p]).sum(axis=1)
    loss_p = w[p] * np.log(inner_p)
    if n.size != 0:
        inner_n = (p1[n] * p2[n]).sum(axis=1)
        log_n = np.log(inner_n)
        log_n[log_n < threshold] = 0.0
        loss_n = 0.2 * w[n] * log_n
        loss_p = np.concatenate([loss_p, loss_n], axis=0)
    return -np.mean(loss_p)


if __name__ == "__main__":
    key = jax.random.PRNGKey(0)

    # --- small demo shapes (typical module usage) ----------------------------
    N, C = 8, 32
    k1, k2, k3 = jax.random.split(key, 3)
    probs1 = jax.nn.softmax(jax.random.normal(k1, (N, C), jnp.float32), axis=1)
    probs2 = jax.nn.softmax(jax.random.normal(k2, (N, C), jnp.float32), axis=1)
    weights = jnp.array([1.0, 0.5, -1.0, 0.0, 2.0, -0.3, 1.5, 0.0], jnp.float32)

    loss_nw = jax.block_until_ready(cluster_consistency_loss(probs1, probs2))
    loss_w = jax.block_until_ready(cluster_consistency_loss(probs1, probs2, weights))
    ref_nw = _reference(probs1, probs2)
    ref_w = _reference(probs1, probs2, np.asarray(weights))
    assert np.allclose(float(loss_nw), ref_nw, rtol=1e-4, atol=1e-5), (loss_nw, ref_nw)
    assert np.allclose(float(loss_w), ref_w, rtol=1e-4, atol=1e-5), (loss_w, ref_w)

    # --- multi-step grid with a ragged last block + weights (no host padding) -
    N2, C2 = 5000, 32
    k4, k5, k6 = jax.random.split(k3, 3)
    q1 = jax.nn.softmax(jax.random.normal(k4, (N2, C2), jnp.float32), axis=1)
    q2 = jax.nn.softmax(jax.random.normal(k5, (N2, C2), jnp.float32), axis=1)
    w2 = jax.random.normal(k6, (N2,), jnp.float32)
    w2 = jnp.where(jnp.abs(w2) < 0.05, 0.0, w2)          # exercise w == 0 exclusion
    loss2 = jax.block_until_ready(cluster_consistency_loss(q1, q2, w2))
    ref2 = _reference(q1, q2, np.asarray(w2))
    assert np.allclose(float(loss2), ref2, rtol=1e-4, atol=1e-5), (loss2, ref2)

    # --- odd N: packing falls back to G=1, partial last block masked ---------
    N3, C3 = 37, 32
    k7, k8, k9 = jax.random.split(k4, 3)
    s1 = jax.nn.softmax(jax.random.normal(k7, (N3, C3), jnp.float32), axis=1)
    s2 = jax.nn.softmax(jax.random.normal(k8, (N3, C3), jnp.float32), axis=1)
    w3 = jax.random.normal(k9, (N3,), jnp.float32)
    loss3a = jax.block_until_ready(cluster_consistency_loss(s1, s2))
    loss3b = jax.block_until_ready(cluster_consistency_loss(s1, s2, w3))
    ref3a = _reference(s1, s2)
    ref3b = _reference(s1, s2, np.asarray(w3))
    assert np.allclose(float(loss3a), ref3a, rtol=1e-4, atol=1e-5), (loss3a, ref3a)
    assert np.allclose(float(loss3b), ref3b, rtol=1e-4, atol=1e-5), (loss3b, ref3b)

    # --- wide-C case (G == 1 path, plain lane reduction) ----------------------
    N4, C4 = 64, 256
    k10, k11 = jax.random.split(k7)
    r1 = jax.nn.softmax(jax.random.normal(k10, (N4, C4), jnp.float32), axis=1)
    r2 = jax.nn.softmax(jax.random.normal(k11, (N4, C4), jnp.float32), axis=1)
    loss4 = jax.block_until_ready(cluster_consistency_loss(r1, r2))
    ref4 = _reference(r1, r2)
    assert np.allclose(float(loss4), ref4, rtol=1e-4, atol=1e-5), (loss4, ref4)

    print("KERNEL_OK")
</pallas_src>

<mosaic_0001>
module attributes {stable_mosaic.version = 11 : i64} {
  func.func @_ccl_kernel(%arg0: i32, %arg1: memref<128x4xf32, #tpu.memory_space<vmem>>, %arg2: memref<2x128xf32, #tpu.memory_space<vmem>>, %arg3: memref<2x128xf32, #tpu.memory_space<vmem>>, %arg4: memref<8x128xf32, #tpu.memory_space<vmem>>) attributes {dimension_semantics = [#tpu.dimension_semantics<parallel>], iteration_bounds = array<i64: 1>, scalar_prefetch = 0 : i64, scratch_operands = 0 : i64, tpu.core_type = #tpu.core_type<tc>, window_params = [{pipeline_mode = #tpu.pipeline_mode<synchronous>, transform_indices = @transform_0, window_bounds = array<i64: 128, 4>}, {transform_indices = @transform_1, window_bounds = array<i64: 2, 128>}, {transform_indices = @transform_2, window_bounds = array<i64: 2, 128>}, {transform_indices = @transform_3, window_bounds = array<i64: 8, 128>}]} {
    %c0 = arith.constant 0 : index
    %c0_0 = arith.constant 0 : index
    %0 = vector.load %arg2[%c0, %c0_0] : memref<2x128xf32, #tpu.memory_space<vmem>>, vector<2x128xf32>
    %c0_1 = arith.constant 0 : index
    %c0_2 = arith.constant 0 : index
    %1 = vector.load %arg3[%c0_1, %c0_2] : memref<2x128xf32, #tpu.memory_space<vmem>>, vector<2x128xf32>
    %2 = arith.mulf %0, %1 : vector<2x128xf32>
    %c0_3 = arith.constant 0 : index
    %c0_4 = arith.constant 0 : index
    %3 = vector.load %arg1[%c0_3, %c0_4] : memref<128x4xf32, #tpu.memory_space<vmem>>, vector<128x4xf32>
    %cst = arith.constant dense<0.000000e+00> : vector<2x4xf32>
    %4 = tpu.matmul %2, %3, %cst {dimension_numbers = #tpu.dot_dimension_numbers<[1], [0], [0], [1], [0, 0, 1, 1], [], []>} : vector<2x128xf32>, vector<128x4xf32>, vector<2x4xf32> -> vector<2x4xf32>
    %c2_i32 = arith.constant 2 : i32
    %5 = arith.muli %arg0, %c2_i32 : i32
    %6 = tpu.iota {dimensions = array<i32: 0>} : vector<2x4xi32>
    %7 = vector.broadcast %5 : i32 to vector<2x4xi32>
    %8 = arith.addi %6, %7 : vector<2x4xi32>
    %c2_i32_5 = arith.constant 2 : i32
    %9 = vector.broadcast %c2_i32_5 : i32 to vector<2x4xi32>
    %10 = arith.cmpi slt, %8, %9 : vector<2x4xi32>
    %cst_6 = arith.constant 1.000000e+00 : f32
    %11 = vector.broadcast %cst_6 : f32 to vector<2x4xf32>
    %12 = arith.select %10, %4, %11 : vector<2x4xi1>, vector<2x4xf32>
    %13 = math.log %12 : vector<2x4xf32>
    %cst_7 = arith.constant dense<0.000000e+00> : vector<2xf32>
    %14 = vector.multi_reduction <add>, %13, %cst_7 [1] : vector<2x4xf32> to vector<2xf32>
    %15 = vector.shape_cast %14 : vector<2xf32> to vector<2x1xf32>
    %cst_8 = arith.constant dense<0.000000e+00> : vector<1xf32>
    %16 = vector.multi_reduction <add>, %15, %cst_8 [0] : vector<2x1xf32> to vector<1xf32>
    %17 = vector.shape_cast %16 : vector<1xf32> to vector<1x1xf32>
    %18 = vector.shape_cast %17 : vector<1x1xf32> to vector<1x1xf32>
    %19 = vector.broadcast %18 : vector<1x1xf32> to vector<8x128xf32>
    %c0_9 = arith.constant 0 : index
    %c0_10 = arith.constant 0 : index
    %20 = vector.load %arg4[%c0_9, %c0_10] : memref<8x128xf32, #tpu.memory_space<vmem>>, vector<8x128xf32>
    tpu.vector_store %arg4[%c0_9, %c0_10], %19 {strides = array<i32>} : memref<8x128xf32, #tpu.memory_space<vmem>>, vector<8x128xf32>,
    return
  }
  func.func @transform_0(%arg0: i32) -> (i32, i32) {
    %c0_i32 = arith.constant 0 : i32
    %c0_i32_0 = arith.constant 0 : i32
    %c0_i32_1 = arith.constant 0 : i32
    return %c0_i32, %c0_i32_0 : i32, i32
  }
  func.func @transform_1(%arg0: i32) -> (i32, i32) {
    %c0_i32 = arith.constant 0 : i32
    %c0_i32_0 = arith.constant 0 : i32
    return %arg0, %c0_i32 : i32, i32
  }
  func.func @transform_2(%arg0: i32) -> (i32, i32) {
    %c0_i32 = arith.constant 0 : i32
    %c0_i32_0 = arith.constant 0 : i32
    return %arg0, %c0_i32 : i32, i32
  }
  func.func @transform_3(%arg0: i32) -> (i32, i32) {
    %c0_i32 = arith.constant 0 : i32
    %c0_i32_0 = arith.constant 0 : i32
    return %arg0, %c0_i32 : i32, i32
  }
}

</mosaic_0001>

<llo_original>
// kernel: tpu_custom_call.1
$region0: #{tpu_custom_call.1}
  #allocation0 [shape = 'u32[]', space=smem, size = 0x4, offset = 0x4, fixed_abs, tag = 'smem constant byte address 0x4 - core index']
  #allocation1 [shape = 'u32[144,128]{1,0:T(1,128)}', space=vmem, size = 0x12000, scoped, tag = 'internal scratch']
  %s0 = inlined_call_operand.vmem [shape: f32[128,4], index: 0, kind: input, shape index: {}]
  %s1 = inlined_call_operand.vmem [shape: f32[2,128], index: 1, kind: input, shape index: {}]
  %s2 = inlined_call_operand.vmem [shape: f32[2,128], index: 2, kind: input, shape index: {}]
  %s3 = inlined_call_operand.hbm [shape: f32[8,128], index: 3, kind: output, shape index: {}]
  %s4 = sld [smem:[#allocation0]]
  $region22: #{tpu_custom_call.1} parent=0
    _
  %s6 = ssub.s32 1, %s4
  %s7 = scalar_select 0, %s6, %s4
  $region1: #{tpu_custom_call.1} parent=0
    #allocation2 [shape = 'u8[4096]{0}', space=vmem, size = 0x1000, scoped, tag = 'output window, operand 0, single buffered']
    #allocation3 [shape = 's32[1]{0}', space=sflag, size = 0x4, scoped, tag = 'scoped memory for tpu_custom_call.1']
    %8 = vsyncpa [#allocation3], 0
    // Predicated region
    $region2: #{tpu_custom_call.1} parent=1 // pred_check
      _
    $region3: #{tpu_custom_call.1} parent=1 // pred_check_branch
      %10 = sbr.rel (0) target = $region5
    $region4: #{tpu_custom_call.1} parent=1 // pred_region
      _
    $region5: #{tpu_custom_call.1} parent=1 // pred_fallthru
      _
    // Predicated region
    $region6: #{tpu_custom_call.1} parent=1 // pred_check
      _
    $region7: #{tpu_custom_call.1} parent=1 // pred_check_branch
      %12 = sbr.rel (0) target = $region9
    $region8: #{tpu_custom_call.1} parent=1 // pred_region
      _
    $region9: #{tpu_custom_call.1} parent=1 // pred_fallthru
      _
    // Predicated region
    $region10: #{tpu_custom_call.1} parent=1 // pred_check
      _
    $region11: #{tpu_custom_call.1} parent=1 // pred_check_branch
      %14 = sbr.rel (0) target = $region13
    $region12: #{tpu_custom_call.1} parent=1 // pred_region
      _
    $region13: #{tpu_custom_call.1} parent=1 // pred_fallthru
      _
    %v15 = vld [vmem:[%s1] sm:$0x3]
    %v16 = vld [vmem:[%s2] sm:$0x3]
    %v17 = vmul.f32 %v15, %v16
    %v18 = vld [vmem:[%s0] sm:$0xff]
    %v19 = vld [vmem:[%s0 + $0x8] sm:$0xff]
    %v20 = vld [vmem:[%s0 + $0x10] sm:$0xff]
    %v21 = vld [vmem:[%s0 + $0x18] sm:$0xff]
    %v22 = vld [vmem:[%s0 + $0x20] sm:$0xff]
    %v23 = vld [vmem:[%s0 + $0x28] sm:$0xff]
    %v24 = vld [vmem:[%s0 + $0x30] sm:$0xff]
    %v25 = vld [vmem:[%s0 + $0x38] sm:$0xff]
    %v26 = vld [vmem:[%s0 + $0x40] sm:$0xff]
    %v27 = vld [vmem:[%s0 + $0x48] sm:$0xff]
    %v28 = vld [vmem:[%s0 + $0x50] sm:$0xff]
    %v29 = vld [vmem:[%s0 + $0x58] sm:$0xff]
    %v30 = vld [vmem:[%s0 + $0x60] sm:$0xff]
    %v31 = vld [vmem:[%s0 + $0x68] sm:$0xff]
    %v32 = vld [vmem:[%s0 + $0x70] sm:$0xff]
    %v33 = vld [vmem:[%s0 + $0x78] sm:$0xff]
    %34 = vmatprep.subr.mxu0 0.0
    %35 = vmatpush1.msra.mxu0 %v18
    %36 = vmatprep.subr.mxu0 0.0
    %37 = vmatpush1.msra.mxu0 %v19
    %38 = vmatprep.subr.mxu0 0.0
    %39 = vmatpush1.msra.mxu0 %v20
    %40 = vmatprep.subr.mxu0 0.0
    %41 = vmatpush1.msra.mxu0 %v21
    %42 = vmatprep.subr.mxu0 0.0
    %43 = vmatpush1.msra.mxu0 %v22
    %44 = vmatprep.subr.mxu0 0.0
    %45 = vmatpush1.msra.mxu0 %v23
    %46 = vmatprep.subr.mxu0 0.0
    %47 = vmatpush1.msra.mxu0 %v24
    %48 = vmatprep.subr.mxu0 0.0
    %49 = vmatpush1.msra.mxu0 %v25
    %50 = vmatprep.subr.mxu0 0.0
    %51 = vmatpush1.msra.mxu0 %v26
    %52 = vmatprep.subr.mxu0 0.0
    %53 = vmatpush1.msra.mxu0 %v27
    %54 = vmatprep.subr.mxu0 0.0
    %55 = vmatpush1.msra.mxu0 %v28
    %56 = vmatprep.subr.mxu0 0.0
    %57 = vmatpush1.msra.mxu0 %v29
    %58 = vmatprep.subr.mxu0 0.0
    %59 = vmatpush1.msra.mxu0 %v30
    %60 = vmatprep.subr.mxu0 0.0
    %61 = vmatpush1.msra.mxu0 %v31
    %62 = vmatprep.subr.mxu0 0.0
    %63 = vmatpush1.msra.mxu0 %v32
    %64 = vmatprep.subr.mxu0 0.0
    %65 = vmatpush1.msra.mxu0 %v33
    %66 = vmatprep.subr.mxu0 0.0
    %67 = vmatpush1.msra.mxu0 0.0
    %68 = vmatprep.subr.mxu0 0.0
    %69 = vmatpush1.msra.mxu0 0.0
    %70 = vmatprep.subr.mxu0 0.0
    %71 = vmatpush1.msra.mxu0 0.0
    %72 = vmatprep.subr.mxu0 0.0
    %73 = vmatpush1.msra.mxu0 0.0
    %74 = vmatprep.subr.mxu0 0.0
    %75 = vmatpush1.msra.mxu0 0.0
    %76 = vmatprep.subr.mxu0 0.0
    %77 = vmatpush1.msra.mxu0 0.0
    %78 = vmatprep.subr.mxu0 0.0
    %79 = vmatpush1.msra.mxu0 0.0
    %80 = vmatprep.subr.mxu0 0.0
    %81 = vmatpush1.msra.mxu0 0.0
    %82 = vmatprep.subr.mxu0 0.0
    %83 = vmatpush1.msra.mxu0 0.0
    %84 = vmatprep.subr.mxu0 0.0
    %85 = vmatpush1.msra.mxu0 0.0
    %86 = vmatprep.subr.mxu0 0.0
    %87 = vmatpush1.msra.mxu0 0.0
    %88 = vmatprep.subr.mxu0 0.0
    %89 = vmatpush1.msra.mxu0 0.0
    %90 = vmatprep.subr.mxu0 0.0
    %91 = vmatpush1.msra.mxu0 0.0
    %92 = vmatprep.subr.mxu0 0.0
    %93 = vmatpush1.msra.mxu0 0.0
    %94 = vmatprep.subr.mxu0 0.0
    %95 = vmatpush1.msra.mxu0 0.0
    %96 = vmatprep.subr.mxu0 0.0
    %97 = vmatpush1.msra.mxu0 0.0
    %98 = vmatprep.mubr.f32.mxu0 0.0
    %99 = vmatmul.mubr.f32.gmra.mrb[0].mxu0 %v17
    %v100 = vpop.f32.mrb[0].mxu0
    %v101 = vadd.f32 0.0, %v100
    %v102 = vpop.f32.mrb[0].mxu0
    %103 = vdwg.mxu0
    %s104 = smul.u32 0, 2
    %v105 = vlaneseq
    %v106 = vshrl.u32 %v105, 7
    %v107 = vstv %s104
    %v108 = vadd.s32 %v106, %v107
    %vm109 = vcmp.lt.s32.totalorder %v108, 2
    %v110 = vsel %vm109, %v101, 1.0
    %v111 = vlog2.pop %v110
    %v112 = vmul.f32 %v111, 0.6931472
    %vm113 = vcmask 25600
    %v114 = vsel %vm113, %v112, 0.0
    %115 = vadd.xlane.f32.xlu0 %v114
    %v116 = vpop.xlane.xlu0 %115
    %vm117 = vcmask 1041408
    %v118 = vsel %vm117, %v116, 0.0
    %v119 = vrot.slane %v118, 4
    %v120 = vadd.f32 %v118, %v119
    %v121 = vrot.slane %v120, 2
    %v122 = vadd.f32 %v120, %v121
    %v123 = vrot.slane %v122, 1
    %v124 = vadd.f32 %v122, %v123
    %125 = vst [vmem:[#allocation2] sm:$0xff] %v124
    // Predicated region
    $region14: #{tpu_custom_call.1} parent=1 // pred_check
      _
    $region15: #{tpu_custom_call.1} parent=1 // pred_check_branch
      %127 = sbr.rel (0) target = $region17
    $region16: #{tpu_custom_call.1} parent=1 // pred_region
      %s129 = ssub.s32 128, 128
      %130 = vsyncadd [#allocation3], %s129
      %s132 = sshll.u32 [#allocation2], 4
      %s133 = int_to_ptr.vmem [resolvable:$true] %s132
      %135 = dma.vmem_to_hbm [thread:$0]  %s133, 128, %s3, [#allocation3]
    $region17: #{tpu_custom_call.1} parent=1 // pred_fallthru
      _
    // Predicated region
    $region18: #{tpu_custom_call.1} parent=1 // pred_check
      _
    $region19: #{tpu_custom_call.1} parent=1 // pred_check_branch
      %137 = sbr.rel (0) target = $region21
    $region20: #{tpu_custom_call.1} parent=1 // pred_region
      %138 = dma.done [#allocation3], 128
    $region21: #{tpu_custom_call.1} parent=1 // pred_fallthru
      _
    %139 = vsyncpa [#allocation3], 1

</llo_original>
